<compile_context>
chip_gen: v7x
topology: tpu7x:2x2x1
jax: 0.10.0
libtpu: 0.0.40
codegen_flags: <defaults>
</compile_context>

<pallas_src>
import functools
import math

import jax
import jax.numpy as jnp
from jax.experimental import pallas as pl
from jax.experimental.pallas import tpu as pltpu

IN_DIM, HID1, HID2, OUT_DIM = 768, 256, 512, 64


def _round_up(x, m):
    return ((x + m - 1) // m) * m


def _default_bf16_act():
    """bf16 tanh only on generations with bf16 EUP/VPU (v6e, v7x and later)."""
    try:
        kind = jax.devices()[0].device_kind.lower()
    except Exception:
        return False
    return not any(g in kind for g in ("v2", "v3", "v4", "v5"))


def _generator_kernel(x_ref, w1_ref, b1_ref, w2_ref, b2_ref, w3_ref, b3_ref,
                      o_ref, *, bf16_act):
    # Layer 1: Linear(in -> 256) + tanh.  bf16 MXU inputs, f32 accumulation.
    x = x_ref[...].astype(jnp.bfloat16)                                   # (tm, in)
    h = jnp.dot(x, w1_ref[...], preferred_element_type=jnp.float32) + b1_ref[...]
    if bf16_act:
        h = jnp.tanh(h.astype(jnp.bfloat16))       # bf16 EUP (v6e/v7x) -> bf16
    else:
        h = jnp.tanh(h).astype(jnp.bfloat16)       # f32 EUP (v5e)      -> bf16

    # Layer 2: Linear(256 -> 512) + tanh.
    h = jnp.dot(h, w2_ref[...], preferred_element_type=jnp.float32) + b2_ref[...]
    if bf16_act:
        h = jnp.tanh(h.astype(jnp.bfloat16))
    else:
        h = jnp.tanh(h).astype(jnp.bfloat16)

    # Layer 3: Linear(512 -> 64, zero-padded to 128 cols) + tanh (kept f32).
    h = jnp.dot(h, w3_ref[...], preferred_element_type=jnp.float32) + b3_ref[...]
    o_ref[...] = jnp.tanh(h).astype(o_ref.dtype)                          # (tm, 128)


def prepare_generator_params(w1, b1, w2, b2, w3, b3):
    """One-time conversion to the kernel-resident layout.

    Inputs are in (in, out) layout (i.e. nn.Linear.weight transposed) with 1-D
    biases.  Returns (w1,b1,w2,b2,w3,b3,out_dim): bf16 weights, f32 row-biases,
    W3/b3 zero-padded to a multiple of 128 output columns.
    """
    h1, h2, out_dim = w1.shape[1], w2.shape[1], w3.shape[1]
    pad_n = _round_up(out_dim, 128)
    w3p = jnp.zeros((w3.shape[0], pad_n), jnp.bfloat16)
    w3p = w3p.at[:, :out_dim].set(w3.astype(jnp.bfloat16))
    b3p = jnp.zeros((1, pad_n), jnp.float32)
    b3p = b3p.at[:, :out_dim].set(b3.reshape(-1).astype(jnp.float32))
    return (
        w1.astype(jnp.bfloat16),
        b1.reshape(1, h1).astype(jnp.float32),
        w2.astype(jnp.bfloat16),
        b2.reshape(1, h2).astype(jnp.float32),
        w3p,
        b3p,
        out_dim,
    )


def generate_model_forward(x, params, *, row_tile=1024, bf16_act=None):
    """x: [..., in_dim] -> [..., out_dim]; params from prepare_generator_params."""
    w1, b1, w2, b2, w3, b3, out_dim = params
    if bf16_act is None:
        bf16_act = _default_bf16_act()

    lead = x.shape[:-1]
    in_dim = x.shape[-1]
    assert in_dim == w1.shape[0]
    h1, h2 = w1.shape[1], w2.shape[1]
    pad_n = w3.shape[1]

    rows = int(math.prod(lead)) if lead else 1
    if rows == 0:
        return jnp.zeros((*lead, out_dim), x.dtype)
    x2 = x.reshape(rows, in_dim)

    # Row tile: multiple of 16 (legal sublane tiling for f32 and bf16 row blocks),
    # capped by row_tile.  No explicit padding of x: Pallas masks the ragged
    # last block's output writes, and pad rows never feed back into real rows.
    assert row_tile % 16 == 0, "row_tile must be a multiple of 16"
    tile = min(row_tile, _round_up(rows, 16))
    # Guarantee >= 2 grid steps for moderate batches so the "parallel" rows
    # axis can shard across both TensorCores on v7x megacore.
    if rows >= 128 and rows <= tile:
        tile = _round_up((rows + 1) // 2, 16)
    grid = (pl.cdiv(rows, tile),)

    kernel = functools.partial(_generator_kernel, bf16_act=bf16_act)

    out = pl.pallas_call(
        kernel,
        out_shape=jax.ShapeDtypeStruct((rows, pad_n), x.dtype),
        grid_spec=pltpu.PrefetchScalarGridSpec(
            num_scalar_prefetch=0,
            grid=grid,
            in_specs=[
                pl.BlockSpec((tile, in_dim), lambda i: (i, 0)),   # x tile (streamed)
                pl.BlockSpec((in_dim, h1), lambda i: (0, 0)),     # W1 (resident)
                pl.BlockSpec((1, h1), lambda i: (0, 0)),          # b1
                pl.BlockSpec((h1, h2), lambda i: (0, 0)),         # W2
                pl.BlockSpec((1, h2), lambda i: (0, 0)),          # b2
                pl.BlockSpec((h2, pad_n), lambda i: (0, 0)),      # W3 (128-col padded)
                pl.BlockSpec((1, pad_n), lambda i: (0, 0)),       # b3
            ],
            out_specs=pl.BlockSpec((tile, pad_n), lambda i: (i, 0)),
        ),
        compiler_params=pltpu.CompilerParams(
            dimension_semantics=("parallel",),
            vmem_limit_bytes=32 * 1024 * 1024,
        ),
    )(x2, w1, b1, w2, b2, w3, b3)

    out = out[:, :out_dim]
    return out.reshape(*lead, out_dim)


def reference_generate(x, w1, b1, w2, b2, w3, b3):
    """Pure f32 JAX reference matching the PyTorch module."""
    xf = x.astype(jnp.float32)
    h = jnp.tanh(xf @ w1 + b1)
    h = jnp.tanh(h @ w2 + b2)
    return jnp.tanh(h @ w3 + b3)


if __name__ == "__main__":
    # Small shapes consistent with the module: in_dim=768 (module default), small batch.
    batch = 16

    key = jax.random.PRNGKey(0)
    kx, k1, kb1, k2, kb2, k3, kb3 = jax.random.split(key, 7)

    x = jax.random.normal(kx, (batch, IN_DIM), dtype=jnp.float32)

    # Synthetic parameters in (in, out) layout (= nn.Linear.weight transposed),
    # scaled like PyTorch's default 1/sqrt(fan_in) init.
    w1 = jax.random.normal(k1, (IN_DIM, HID1), dtype=jnp.float32) / math.sqrt(IN_DIM)
    b1 = jax.random.normal(kb1, (HID1,), dtype=jnp.float32) / math.sqrt(IN_DIM)
    w2 = jax.random.normal(k2, (HID1, HID2), dtype=jnp.float32) / math.sqrt(HID1)
    b2 = jax.random.normal(kb2, (HID2,), dtype=jnp.float32) / math.sqrt(HID1)
    w3 = jax.random.normal(k3, (HID2, OUT_DIM), dtype=jnp.float32) / math.sqrt(HID2)
    b3 = jax.random.normal(kb3, (OUT_DIM,), dtype=jnp.float32) / math.sqrt(HID2)

    # One-time parameter conversion (bf16 weights, padded W3/b3) outside the call.
    params = prepare_generator_params(w1, b1, w2, b2, w3, b3)

    out = generate_model_forward(x, params)
    out = jax.block_until_ready(out)

    ref = reference_generate(x, w1, b1, w2, b2, w3, b3)
    assert out.shape == (batch, OUT_DIM)
    # bf16 MXU inputs / bf16 activations with f32 accumulation vs pure-f32
    # reference: loosen tolerance (tanh saturation bounds the error).
    assert jnp.allclose(out, ref, atol=2e-2, rtol=2e-2), "mismatch vs reference"

    print("KERNEL_OK")
</pallas_src>

<mosaic_0001>
module attributes {stable_mosaic.version = 11 : i64} {
  func.func @_generator_kernel(%arg0: i32, %arg1: memref<16x768xf32, #tpu.memory_space<vmem>>, %arg2: memref<768x256xbf16, #tpu.memory_space<vmem>>, %arg3: memref<1x256xf32, #tpu.memory_space<vmem>>, %arg4: memref<256x512xbf16, #tpu.memory_space<vmem>>, %arg5: memref<1x512xf32, #tpu.memory_space<vmem>>, %arg6: memref<512x128xbf16, #tpu.memory_space<vmem>>, %arg7: memref<1x128xf32, #tpu.memory_space<vmem>>, %arg8: memref<16x128xf32, #tpu.memory_space<vmem>>) attributes {dimension_semantics = [#tpu.dimension_semantics<parallel>], iteration_bounds = array<i64: 1>, scalar_prefetch = 0 : i64, scratch_operands = 0 : i64, tpu.core_type = #tpu.core_type<tc>, window_params = [{transform_indices = @transform_0, window_bounds = array<i64: 16, 768>}, {pipeline_mode = #tpu.pipeline_mode<synchronous>, transform_indices = @transform_1, window_bounds = array<i64: 768, 256>}, {pipeline_mode = #tpu.pipeline_mode<synchronous>, transform_indices = @transform_2, window_bounds = array<i64: 1, 256>}, {pipeline_mode = #tpu.pipeline_mode<synchronous>, transform_indices = @transform_3, window_bounds = array<i64: 256, 512>}, {pipeline_mode = #tpu.pipeline_mode<synchronous>, transform_indices = @transform_4, window_bounds = array<i64: 1, 512>}, {pipeline_mode = #tpu.pipeline_mode<synchronous>, transform_indices = @transform_5, window_bounds = array<i64: 512, 128>}, {pipeline_mode = #tpu.pipeline_mode<synchronous>, transform_indices = @transform_6, window_bounds = array<i64: 1, 128>}, {transform_indices = @transform_7, window_bounds = array<i64: 16, 128>}]} {
    %c0 = arith.constant 0 : index
    %c0_0 = arith.constant 0 : index
    %0 = vector.load %arg1[%c0, %c0_0] : memref<16x768xf32, #tpu.memory_space<vmem>>, vector<16x768xf32>
    %1 = arith.truncf %0 : vector<16x768xf32> to vector<16x768xbf16>
    %c0_1 = arith.constant 0 : index
    %c0_2 = arith.constant 0 : index
    %2 = vector.load %arg2[%c0_1, %c0_2] : memref<768x256xbf16, #tpu.memory_space<vmem>>, vector<768x256xbf16>
    %cst = arith.constant dense<0.000000e+00> : vector<16x256xf32>
    %3 = tpu.matmul %1, %2, %cst {dimension_numbers = #tpu.dot_dimension_numbers<[1], [0], [0], [1], [0, 0, 1, 1], [], []>} : vector<16x768xbf16>, vector<768x256xbf16>, vector<16x256xf32> -> vector<16x256xf32>
    %c0_3 = arith.constant 0 : index
    %c0_4 = arith.constant 0 : index
    %4 = vector.load %arg3[%c0_3, %c0_4] : memref<1x256xf32, #tpu.memory_space<vmem>>, vector<1x256xf32>
    %5 = vector.broadcast %4 : vector<1x256xf32> to vector<16x256xf32>
    %6 = arith.addf %3, %5 : vector<16x256xf32>
    %7 = arith.truncf %6 : vector<16x256xf32> to vector<16x256xbf16>
    %8 = math.tanh %7 : vector<16x256xbf16>
    %c0_5 = arith.constant 0 : index
    %c0_6 = arith.constant 0 : index
    %9 = vector.load %arg4[%c0_5, %c0_6] : memref<256x512xbf16, #tpu.memory_space<vmem>>, vector<256x512xbf16>
    %cst_7 = arith.constant dense<0.000000e+00> : vector<16x512xf32>
    %10 = tpu.matmul %8, %9, %cst_7 {dimension_numbers = #tpu.dot_dimension_numbers<[1], [0], [0], [1], [0, 0, 1, 1], [], []>} : vector<16x256xbf16>, vector<256x512xbf16>, vector<16x512xf32> -> vector<16x512xf32>
    %c0_8 = arith.constant 0 : index
    %c0_9 = arith.constant 0 : index
    %11 = vector.load %arg5[%c0_8, %c0_9] : memref<1x512xf32, #tpu.memory_space<vmem>>, vector<1x512xf32>
    %12 = vector.broadcast %11 : vector<1x512xf32> to vector<16x512xf32>
    %13 = arith.addf %10, %12 : vector<16x512xf32>
    %14 = arith.truncf %13 : vector<16x512xf32> to vector<16x512xbf16>
    %15 = math.tanh %14 : vector<16x512xbf16>
    %c0_10 = arith.constant 0 : index
    %c0_11 = arith.constant 0 : index
    %16 = vector.load %arg6[%c0_10, %c0_11] : memref<512x128xbf16, #tpu.memory_space<vmem>>, vector<512x128xbf16>
    %cst_12 = arith.constant dense<0.000000e+00> : vector<16x128xf32>
    %17 = tpu.matmul %15, %16, %cst_12 {dimension_numbers = #tpu.dot_dimension_numbers<[1], [0], [0], [1], [0, 0, 1, 1], [], []>} : vector<16x512xbf16>, vector<512x128xbf16>, vector<16x128xf32> -> vector<16x128xf32>
    %c0_13 = arith.constant 0 : index
    %c0_14 = arith.constant 0 : index
    %18 = vector.load %arg7[%c0_13, %c0_14] : memref<1x128xf32, #tpu.memory_space<vmem>>, vector<1x128xf32>
    %19 = vector.broadcast %18 : vector<1x128xf32> to vector<16x128xf32>
    %20 = arith.addf %17, %19 : vector<16x128xf32>
    %21 = math.tanh %20 : vector<16x128xf32>
    %c0_15 = arith.constant 0 : index
    %c0_16 = arith.constant 0 : index
    %22 = vector.load %arg8[%c0_15, %c0_16] : memref<16x128xf32, #tpu.memory_space<vmem>>, vector<16x128xf32>
    tpu.vector_store %arg8[%c0_15, %c0_16], %21 {strides = array<i32>} : memref<16x128xf32, #tpu.memory_space<vmem>>, vector<16x128xf32>,
    return
  }
  func.func @transform_0(%arg0: i32) -> (i32, i32) {
    %c0_i32 = arith.constant 0 : i32
    %c0_i32_0 = arith.constant 0 : i32
    return %arg0, %c0_i32 : i32, i32
  }
  func.func @transform_1(%arg0: i32) -> (i32, i32) {
    %c0_i32 = arith.constant 0 : i32
    %c0_i32_0 = arith.constant 0 : i32
    %c0_i32_1 = arith.constant 0 : i32
    return %c0_i32, %c0_i32_0 : i32, i32
  }
  func.func @transform_2(%arg0: i32) -> (i32, i32) {
    %c0_i32 = arith.constant 0 : i32
    %c0_i32_0 = arith.constant 0 : i32
    %c0_i32_1 = arith.constant 0 : i32
    return %c0_i32, %c0_i32_0 : i32, i32
  }
  func.func @transform_3(%arg0: i32) -> (i32, i32) {
    %c0_i32 = arith.constant 0 : i32
    %c0_i32_0 = arith.constant 0 : i32
    %c0_i32_1 = arith.constant 0 : i32
    return %c0_i32, %c0_i32_0 : i32, i32
  }
  func.func @transform_4(%arg0: i32) -> (i32, i32) {
    %c0_i32 = arith.constant 0 : i32
    %c0_i32_0 = arith.constant 0 : i32
    %c0_i32_1 = arith.constant 0 : i32
    return %c0_i32, %c0_i32_0 : i32, i32
  }
  func.func @transform_5(%arg0: i32) -> (i32, i32) {
    %c0_i32 = arith.constant 0 : i32
    %c0_i32_0 = arith.constant 0 : i32
    %c0_i32_1 = arith.constant 0 : i32
    return %c0_i32, %c0_i32_0 : i32, i32
  }
  func.func @transform_6(%arg0: i32) -> (i32, i32) {
    %c0_i32 = arith.constant 0 : i32
    %c0_i32_0 = arith.constant 0 : i32
    %c0_i32_1 = arith.constant 0 : i32
    return %c0_i32, %c0_i32_0 : i32, i32
  }
  func.func @transform_7(%arg0: i32) -> (i32, i32) {
    %c0_i32 = arith.constant 0 : i32
    %c0_i32_0 = arith.constant 0 : i32
    return %arg0, %c0_i32 : i32, i32
  }
}

</mosaic_0001>

<llo_original>
// kernel: tpu_custom_call.1
$region0: #{tpu_custom_call.1}
  #allocation0 [shape = 'u32[]', space=smem, size = 0x4, offset = 0x4, fixed_abs, tag = 'smem constant byte address 0x4 - core index']
  #allocation1 [shape = 'u32[144,128]{1,0:T(1,128)}', space=vmem, size = 0x12000, scoped, tag = 'internal scratch']
  %s0 = inlined_call_operand.hbm [shape: f32[16,768], index: 0, kind: input, shape index: {}]
  %s1 = inlined_call_operand.hbm [shape: bf16[768,256], index: 1, kind: input, shape index: {}]
  %s2 = inlined_call_operand.vmem [shape: f32[1,256], index: 2, kind: input, shape index: {}]
  %s3 = inlined_call_operand.hbm [shape: bf16[256,512], index: 3, kind: input, shape index: {}]
  %s4 = inlined_call_operand.vmem [shape: f32[1,512], index: 4, kind: input, shape index: {}]
  %s5 = inlined_call_operand.hbm [shape: bf16[512,128], index: 5, kind: input, shape index: {}]
  %s6 = inlined_call_operand.vmem [shape: f32[1,128], index: 6, kind: input, shape index: {}]
  %s7 = inlined_call_operand.hbm [shape: f32[16,128], index: 7, kind: output, shape index: {}]
  %s8 = sld [smem:[#allocation0]]
  $region54: #{tpu_custom_call.1} parent=0
    _
  %s10 = ssub.s32 1, %s8
  %s11 = scalar_select 0, %s10, %s8
  $region1: #{tpu_custom_call.1} parent=0
    #allocation2 [shape = 'u8[49152]{0}', space=vmem, size = 0xc000, scoped, tag = 'input window, operand 0, single buffered']
    #allocation3 [shape = 's32[1]{0}', space=sflag, size = 0x4, scoped, tag = 'scoped memory for tpu_custom_call.1']
    #allocation4 [shape = 's32[1]{0}', space=sflag, size = 0x4, scoped, tag = 'scoped memory for tpu_custom_call.1']
    #allocation5 [shape = 'u8[393216]{0}', space=vmem, size = 0x60000, scoped, tag = 'input window, operand 1, single buffered']
    #allocation6 [shape = 's32[1]{0}', space=sflag, size = 0x4, scoped, tag = 'scoped memory for tpu_custom_call.1']
    #allocation7 [shape = 'u8[262144]{0}', space=vmem, size = 0x40000, scoped, tag = 'input window, operand 3, single buffered']
    #allocation8 [shape = 'u8[131072]{0}', space=vmem, size = 0x20000, scoped, tag = 'input window, operand 5, single buffered']
    #allocation9 [shape = 's32[1]{0}', space=sflag, size = 0x4, scoped, tag = 'scoped memory for tpu_custom_call.1']
    #allocation10 [shape = 'u8[8192]{0}', space=vmem, size = 0x2000, scoped, tag = 'output window, operand 0, single buffered']
    %12 = vsyncpa [#allocation3], 0
    %13 = vsyncpa [#allocation6], 0
    %14 = vsyncpa [#allocation9], 0
    %15 = vsyncpa [#allocation4], 0
    // Predicated region
    $region2: #{tpu_custom_call.1} parent=1 // pred_check
      _
    $region3: #{tpu_custom_call.1} parent=1 // pred_check_branch
      %17 = sbr.rel (0) target = $region5
    $region4: #{tpu_custom_call.1} parent=1 // pred_region
      %s19 = ssub.s32 1536, 1536
      %20 = vsyncadd [#allocation3], %s19
      %s21 = sshll.u32 [#allocation2], 4
      %s22 = int_to_ptr.vmem [resolvable:$true] %s21
      %27 = dma.hbm_to_vmem [thread:$0]  %s0, 1536, %s22, [#allocation3], 768, 768, 48
    $region5: #{tpu_custom_call.1} parent=1 // pred_fallthru
      _
    // Predicated region
    $region6: #{tpu_custom_call.1} parent=1 // pred_check
      _
    $region7: #{tpu_custom_call.1} parent=1 // pred_check_branch
      %29 = sbr.rel (0) target = $region9
    $region8: #{tpu_custom_call.1} parent=1 // pred_region
      %s31 = ssub.s32 12288, 12288
      %32 = vsyncadd [#allocation6], %s31
      %s33 = sshll.u32 [#allocation5], 4
      %s34 = int_to_ptr.vmem [resolvable:$true] %s33
      %39 = dma.hbm_to_vmem [thread:$0]  %s1, 12288, %s34, [#allocation6], 128, 128, 8
    $region9: #{tpu_custom_call.1} parent=1 // pred_fallthru
      _
    // Predicated region
    $region10: #{tpu_custom_call.1} parent=1 // pred_check
      _
    $region11: #{tpu_custom_call.1} parent=1 // pred_check_branch
      %41 = sbr.rel (0) target = $region13
    $region12: #{tpu_custom_call.1} parent=1 // pred_region
      _
    $region13: #{tpu_custom_call.1} parent=1 // pred_fallthru
      _
    // Predicated region
    $region14: #{tpu_custom_call.1} parent=1 // pred_check
      _
    $region15: #{tpu_custom_call.1} parent=1 // pred_check_branch
      %43 = sbr.rel (0) target = $region17
    $region16: #{tpu_custom_call.1} parent=1 // pred_region
      %s45 = ssub.s32 8192, 8192
      %46 = vsyncadd [#allocation6], %s45
      %s47 = sshll.u32 [#allocation7], 4
      %s48 = int_to_ptr.vmem [resolvable:$true] %s47
      %53 = dma.hbm_to_vmem [thread:$0]  %s3, 8192, %s48, [#allocation6], 256, 256, 16
    $region17: #{tpu_custom_call.1} parent=1 // pred_fallthru
      _
    // Predicated region
    $region18: #{tpu_custom_call.1} parent=1 // pred_check
      _
    $region19: #{tpu_custom_call.1} parent=1 // pred_check_branch
      %55 = sbr.rel (0) target = $region21
    $region20: #{tpu_custom_call.1} parent=1 // pred_region
      _
    $region21: #{tpu_custom_call.1} parent=1 // pred_fallthru
      _
    // Predicated region
    $region22: #{tpu_custom_call.1} parent=1 // pred_check
      _
    $region23: #{tpu_custom_call.1} parent=1 // pred_check_branch
      %57 = sbr.rel (0) target = $region25
    $region24: #{tpu_custom_call.1} parent=1 // pred_region
      %s59 = ssub.s32 4096, 4096
      %60 = vsyncadd [#allocation9], %s59
      %s61 = sshll.u32 [#allocation8], 4
      %s62 = int_to_ptr.vmem [resolvable:$true] %s61
      %67 = dma.hbm_to_vmem [thread:$0]  %s5, 4096, %s62, [#allocation9], 64, 64, 4
    $region25: #{tpu_custom_call.1} parent=1 // pred_fallthru
      _
    // Predicated region
    $region26: #{tpu_custom_call.1} parent=1 // pred_check
      _
    $region27: #{tpu_custom_call.1} parent=1 // pred_check_branch
      %69 = sbr.rel (0) target = $region29
    $region28: #{tpu_custom_call.1} parent=1 // pred_region
      _
    $region29: #{tpu_custom_call.1} parent=1 // pred_fallthru
      _
    // Predicated region
    $region30: #{tpu_custom_call.1} parent=1 // pred_check
      _
    $region31: #{tpu_custom_call.1} parent=1 // pred_check_branch
      %71 = sbr.rel (0) target = $region33
    $region32: #{tpu_custom_call.1} parent=1 // pred_region
      %72 = dma.done [#allocation3], 1536
    $region33: #{tpu_custom_call.1} parent=1 // pred_fallthru
      _
    // Predicated region
    $region34: #{tpu_custom_call.1} parent=1 // pred_check
      _
    $region35: #{tpu_custom_call.1} parent=1 // pred_check_branch
      %74 = sbr.rel (0) target = $region37
    $region36: #{tpu_custom_call.1} parent=1 // pred_region
      %75 = dma.done [#allocation6], 12288
    $region37: #{tpu_custom_call.1} parent=1 // pred_fallthru
      _
    // Predicated region
    $region38: #{tpu_custom_call.1} parent=1 // pred_check
      _
    $region39: #{tpu_custom_call.1} parent=1 // pred_check_branch
      %77 = sbr.rel (0) target = $region41
    $region40: #{tpu_custom_call.1} parent=1 // pred_region
      %78 = dma.done [#allocation6], 8192
    $region41: #{tpu_custom_call.1} parent=1 // pred_fallthru
      _
    // Predicated region
    $region42: #{tpu_custom_call.1} parent=1 // pred_check
      _
    $region43: #{tpu_custom_call.1} parent=1 // pred_check_branch
      %80 = sbr.rel (0) target = $region45
    $region44: #{tpu_custom_call.1} parent=1 // pred_region
      %81 = dma.done [#allocation9], 4096
    $region45: #{tpu_custom_call.1} parent=1 // pred_fallthru
      _
    %v83 = vld [vmem:[#allocation2] sm:$0xff]
    %v84 = vld [vmem:[#allocation2 + $0x8] sm:$0xff]
    %v85 = vld [vmem:[#allocation2 + $0x10] sm:$0xff]
    %v86 = vld [vmem:[#allocation2 + $0x18] sm:$0xff]
    %v87 = vld [vmem:[#allocation2 + $0x20] sm:$0xff]
    %v88 = vld [vmem:[#allocation2 + $0x28] sm:$0xff]
    %v89 = vld [vmem:[#allocation2 + $0x30] sm:$0xff]
    %v90 = vld [vmem:[#allocation2 + $0x38] sm:$0xff]
    %v91 = vld [vmem:[#allocation2 + $0x40] sm:$0xff]
    %v92 = vld [vmem:[#allocation2 + $0x48] sm:$0xff]
    %v93 = vld [vmem:[#allocation2 + $0x50] sm:$0xff]
    %v94 = vld [vmem:[#allocation2 + $0x58] sm:$0xff]
    %v95 = vpack.c.bf16 %v89, %v83
    %v96 = vpack.c.bf16 %v90, %v84
    %v97 = vpack.c.bf16 %v91, %v85
    %v98 = vpack.c.bf16 %v92, %v86
    %v99 = vpack.c.bf16 %v93, %v87
    %v100 = vpack.c.bf16 %v94, %v88
    %v101 = vld [vmem:[#allocation5] sm:$0xff]
    %v102 = vld [vmem:[#allocation5 + $0x8] sm:$0xff]
    %v103 = vld [vmem:[#allocation5 + $0x10] sm:$0xff]
    %v104 = vld [vmem:[#allocation5 + $0x18] sm:$0xff]
    %v105 = vld [vmem:[#allocation5 + $0x20] sm:$0xff]
    %v106 = vld [vmem:[#allocation5 + $0x28] sm:$0xff]
    %v107 = vld [vmem:[#allocation5 + $0x30] sm:$0xff]
    %v108 = vld [vmem:[#allocation5 + $0x38] sm:$0xff]
    %v109 = vld [vmem:[#allocation5 + $0x40] sm:$0xff]
    %v110 = vld [vmem:[#allocation5 + $0x48] sm:$0xff]
    %v111 = vld [vmem:[#allocation5 + $0x50] sm:$0xff]
    %v112 = vld [vmem:[#allocation5 + $0x58] sm:$0xff]
    %v113 = vld [vmem:[#allocation5 + $0x60] sm:$0xff]
    %v114 = vld [vmem:[#allocation5 + $0x68] sm:$0xff]
    %v115 = vld [vmem:[#allocation5 + $0x70] sm:$0xff]
    %v116 = vld [vmem:[#allocation5 + $0x78] sm:$0xff]
    %v117 = vld [vmem:[#allocation5 + $0x80] sm:$0xff]
    %v118 = vld [vmem:[#allocation5 + $0x88] sm:$0xff]
    %v119 = vld [vmem:[#allocation5 + $0x90] sm:$0xff]
    %v120 = vld [vmem:[#allocation5 + $0x98] sm:$0xff]
    %v121 = vld [vmem:[#allocation5 + $0xa0] sm:$0xff]
    %v122 = vld [vmem:[#allocation5 + $0xa8] sm:$0xff]
    %v123 = vld [vmem:[#allocation5 + $0xb0] sm:$0xff]
    %v124 = vld [vmem:[#allocation5 + $0xb8] sm:$0xff]
    %v125 = vld [vmem:[#allocation5 + $0xc0] sm:$0xff]
    %v126 = vld [vmem:[#allocation5 + $0xc8] sm:$0xff]
    %v127 = vld [vmem:[#allocation5 + $0xd0] sm:$0xff]
    %v128 = vld [vmem:[#allocation5 + $0xd8] sm:$0xff]
    %v129 = vld [vmem:[#allocation5 + $0xe0] sm:$0xff]
    %v130 = vld [vmem:[#allocation5 + $0xe8] sm:$0xff]
    %v131 = vld [vmem:[#allocation5 + $0xf0] sm:$0xff]
    %v132 = vld [vmem:[#allocation5 + $0xf8] sm:$0xff]
    %v133 = vld [vmem:[#allocation5 + $0x100] sm:$0xff]
    %v134 = vld [vmem:[#allocation5 + $0x108] sm:$0xff]
    %v135 = vld [vmem:[#allocation5 + $0x110] sm:$0xff]
    %v136 = vld [vmem:[#allocation5 + $0x118] sm:$0xff]
    %v137 = vld [vmem:[#allocation5 + $0x120] sm:$0xff]
    %v138 = vld [vmem:[#allocation5 + $0x128] sm:$0xff]
    %v139 = vld [vmem:[#allocation5 + $0x130] sm:$0xff]
    %v140 = vld [vmem:[#allocation5 + $0x138] sm:$0xff]
    %v141 = vld [vmem:[#allocation5 + $0x140] sm:$0xff]
    %v142 = vld [vmem:[#allocation5 + $0x148] sm:$0xff]
    %v143 = vld [vmem:[#allocation5 + $0x150] sm:$0xff]
    %v144 = vld [vmem:[#allocation5 + $0x158] sm:$0xff]
    %v145 = vld [vmem:[#allocation5 + $0x160] sm:$0xff]
    %v146 = vld [vmem:[#allocation5 + $0x168] sm:$0xff]
    %v147 = vld [vmem:[#allocation5 + $0x170] sm:$0xff]
    %v148 = vld [vmem:[#allocation5 + $0x178] sm:$0xff]
    %v149 = vld [vmem:[#allocation5 + $0x180] sm:$0xff]
    %v150 = vld [vmem:[#allocation5 + $0x188] sm:$0xff]
    %v151 = vld [vmem:[#allocation5 + $0x190] sm:$0xff]
    %v152 = vld [vmem:[#allocation5 + $0x198] sm:$0xff]
    %v153 = vld [vmem:[#allocation5 + $0x1a0] sm:$0xff]
    %v154 = vld [vmem:[#allocation5 + $0x1a8] sm:$0xff]
    %v155 = vld [vmem:[#allocation5 + $0x1b0] sm:$0xff]
    %v156 = vld [vmem:[#allocation5 + $0x1b8] sm:$0xff]
    %v157 = vld [vmem:[#allocation5 + $0x1c0] sm:$0xff]
    %v158 = vld [vmem:[#allocation5 + $0x1c8] sm:$0xff]
    %v159 = vld [vmem:[#allocation5 + $0x1d0] sm:$0xff]
    %v160 = vld [vmem:[#allocation5 + $0x1d8] sm:$0xff]
    %v161 = vld [vmem:[#allocation5 + $0x1e0] sm:$0xff]
    %v162 = vld [vmem:[#allocation5 + $0x1e8] sm:$0xff]
    %v163 = vld [vmem:[#allocation5 + $0x1f0] sm:$0xff]
    %v164 = vld [vmem:[#allocation5 + $0x1f8] sm:$0xff]
    %v165 = vld [vmem:[#allocation5 + $0x200] sm:$0xff]
    %v166 = vld [vmem:[#allocation5 + $0x208] sm:$0xff]
    %v167 = vld [vmem:[#allocation5 + $0x210] sm:$0xff]
    %v168 = vld [vmem:[#allocation5 + $0x218] sm:$0xff]
    %v169 = vld [vmem:[#allocation5 + $0x220] sm:$0xff]
    %v170 = vld [vmem:[#allocation5 + $0x228] sm:$0xff]
    %v171 = vld [vmem:[#allocation5 + $0x230] sm:$0xff]
    %v172 = vld [vmem:[#allocation5 + $0x238] sm:$0xff]
    %v173 = vld [vmem:[#allocation5 + $0x240] sm:$0xff]
    %v174 = vld [vmem:[#allocation5 + $0x248] sm:$0xff]
    %v175 = vld [vmem:[#allocation5 + $0x250] sm:$0xff]
    %v176 = vld [vmem:[#allocation5 + $0x258] sm:$0xff]
    %v177 = vld [vmem:[#allocation5 + $0x260] sm:$0xff]
    %v178 = vld [vmem:[#allocation5 + $0x268] sm:$0xff]
    %v179 = vld [vmem:[#allocation5 + $0x270] sm:$0xff]
    %v180 = vld [vmem:[#allocation5 + $0x278] sm:$0xff]
    %v181 = vld [vmem:[#allocation5 + $0x280] sm:$0xff]
    %v182 = vld [vmem:[#allocation5 + $0x288] sm:$0xff]
    %v183 = vld [vmem:[#allocation5 + $0x290] sm:$0xff]
    %v184 = vld [vmem:[#allocation5 + $0x298] sm:$0xff]
    %v185 = vld [vmem:[#allocation5 + $0x2a0] sm:$0xff]
    %v186 = vld [vmem:[#allocation5 + $0x2a8] sm:$0xff]
    %v187 = vld [vmem:[#allocation5 + $0x2b0] sm:$0xff]
    %v188 = vld [vmem:[#allocation5 + $0x2b8] sm:$0xff]
    %v189 = vld [vmem:[#allocation5 + $0x2c0] sm:$0xff]
    %v190 = vld [vmem:[#allocation5 + $0x2c8] sm:$0xff]
    %v191 = vld [vmem:[#allocation5 + $0x2d0] sm:$0xff]
    %v192 = vld [vmem:[#allocation5 + $0x2d8] sm:$0xff]
    %v193 = vld [vmem:[#allocation5 + $0x2e0] sm:$0xff]
    %v194 = vld [vmem:[#allocation5 + $0x2e8] sm:$0xff]
    %v195 = vld [vmem:[#allocation5 + $0x2f0] sm:$0xff]
    %v196 = vld [vmem:[#allocation5 + $0x2f8] sm:$0xff]
    %v197 = vld [vmem:[%s2] sm:$0x3]
    %v199 = vlaneseq
    %v200 = vshrl.u32 %v199, 7
    %v201 = vsub.s32 0, %v200
    %v202 = vrot.slane %v197, %v201
    %v203 = vlaneseq
    %v204 = vshrl.u32 %v203, 7
    %v205 = vsub.s32 1, %v204
    %v206 = vrot.slane %v197, %v205
    %v305 = vunpack.c.l.b16 %v101
    %v306 = vunpack.c.h.b16 %v101
    %v307 = vunpack.c.l.b16 %v102
    %v308 = vunpack.c.h.b16 %v102
    %v309 = vunpack.c.l.b16 %v103
    %v310 = vunpack.c.h.b16 %v103
    %v311 = vunpack.c.l.b16 %v104
    %v312 = vunpack.c.h.b16 %v104
    %v313 = vunpack.c.l.b16 %v105
    %v314 = vunpack.c.h.b16 %v105
    %v315 = vunpack.c.l.b16 %v106
    %v316 = vunpack.c.h.b16 %v106
    %v317 = vunpack.c.l.b16 %v107
    %v318 = vunpack.c.h.b16 %v107
    %v319 = vunpack.c.l.b16 %v108
    %v320 = vunpack.c.h.b16 %v108
    %v321 = vunpack.c.l.b16 %v109
    %v322 = vunpack.c.h.b16 %v109
    %v323 = vunpack.c.l.b16 %v110
    %v324 = vunpack.c.h.b16 %v110
    %v325 = vunpack.c.l.b16 %v111
    %v326 = vunpack.c.h.b16 %v111
    %v327 = vunpack.c.l.b16 %v112
    %v328 = vunpack.c.h.b16 %v112
    %v329 = vunpack.c.l.b16 %v113
    %v330 = vunpack.c.h.b16 %v113
    %v331 = vunpack.c.l.b16 %v114
    %v332 = vunpack.c.h.b16 %v114
    %v333 = vunpack.c.l.b16 %v115
    %v334 = vunpack.c.h.b16 %v115
    %v335 = vunpack.c.l.b16 %v116
    %v336 = vunpack.c.h.b16 %v116
    %v337 = vunpack.c.l.b16 %v117
    %v338 = vunpack.c.h.b16 %v117
    %v339 = vunpack.c.l.b16 %v118
    %v340 = vunpack.c.h.b16 %v118
    %v341 = vunpack.c.l.b16 %v119
    %v342 = vunpack.c.h.b16 %v119
    %v343 = vunpack.c.l.b16 %v120
    %v344 = vunpack.c.h.b16 %v120
    %v345 = vunpack.c.l.b16 %v121
    %v346 = vunpack.c.h.b16 %v121
    %v347 = vunpack.c.l.b16 %v122
    %v348 = vunpack.c.h.b16 %v122
    %v349 = vunpack.c.l.b16 %v123
    %v350 = vunpack.c.h.b16 %v123
    %v351 = vunpack.c.l.b16 %v124
    %v352 = vunpack.c.h.b16 %v124
    %v353 = vunpack.c.l.b16 %v125
    %v354 = vunpack.c.h.b16 %v125
    %v355 = vunpack.c.l.b16 %v126
    %v356 = vunpack.c.h.b16 %v126
    %v357 = vunpack.c.l.b16 %v127
    %v358 = vunpack.c.h.b16 %v127
    %v359 = vunpack.c.l.b16 %v128
    %v360 = vunpack.c.h.b16 %v128
    %v361 = vunpack.c.l.b16 %v129
    %v362 = vunpack.c.h.b16 %v129
    %v363 = vunpack.c.l.b16 %v130
    %v364 = vunpack.c.h.b16 %v130
    %v365 = vunpack.c.l.b16 %v131
    %v366 = vunpack.c.h.b16 %v131
    %v367 = vunpack.c.l.b16 %v132
    %v368 = vunpack.c.h.b16 %v132
    %v369 = vunpack.c.l.b16 %v133
    %v370 = vunpack.c.h.b16 %v133
    %v371 = vunpack.c.l.b16 %v134
    %v372 = vunpack.c.h.b16 %v134
    %v373 = vunpack.c.l.b16 %v135
    %v374 = vunpack.c.h.b16 %v135
    %v375 = vunpack.c.l.b16 %v136
    %v376 = vunpack.c.h.b16 %v136
    %v377 = vunpack.c.l.b16 %v137
    %v378 = vunpack.c.h.b16 %v137
    %v379 = vunpack.c.l.b16 %v138
    %v380 = vunpack.c.h.b16 %v138
    %v381 = vunpack.c.l.b16 %v139
    %v382 = vunpack.c.h.b16 %v139
    %v383 = vunpack.c.l.b16 %v140
    %v384 = vunpack.c.h.b16 %v140
    %v385 = vunpack.c.l.b16 %v141
    %v386 = vunpack.c.h.b16 %v141
    %v387 = vunpack.c.l.b16 %v142
    %v388 = vunpack.c.h.b16 %v142
    %v389 = vunpack.c.l.b16 %v143
    %v390 = vunpack.c.h.b16 %v143
    %v391 = vunpack.c.l.b16 %v144
    %v392 = vunpack.c.h.b16 %v144
    %v393 = vunpack.c.l.b16 %v145
    %v394 = vunpack.c.h.b16 %v145
    %v395 = vunpack.c.l.b16 %v146
    %v396 = vunpack.c.h.b16 %v146
    %v397 = vunpack.c.l.b16 %v147
    %v398 = vunpack.c.h.b16 %v147
    %v399 = vunpack.c.l.b16 %v148
    %v400 = vunpack.c.h.b16 %v148
    %v401 = vunpack.c.l.b16 %v149
    %v402 = vunpack.c.h.b16 %v149
    %v403 = vunpack.c.l.b16 %v150
    %v404 = vunpack.c.h.b16 %v150
    %v405 = vunpack.c.l.b16 %v151
    %v406 = vunpack.c.h.b16 %v151
    %v407 = vunpack.c.l.b16 %v152
    %v408 = vunpack.c.h.b16 %v152
    %v409 = vunpack.c.l.b16 %v153
    %v410 = vunpack.c.h.b16 %v153
    %v411 = vunpack.c.l.b16 %v154
    %v412 = vunpack.c.h.b16 %v154
    %v413 = vunpack.c.l.b16 %v155
    %v414 = vunpack.c.h.b16 %v155
    %v415 = vunpack.c.l.b16 %v156
    %v416 = vunpack.c.h.b16 %v156
    %v417 = vunpack.c.l.b16 %v157
    %v418 = vunpack.c.h.b16 %v157
    %v419 = vunpack.c.l.b16 %v158
    %v420 = vunpack.c.h.b16 %v158
    %v421 = vunpack.c.l.b16 %v159
    %v422 = vunpack.c.h.b16 %v159
    %v423 = vunpack.c.l.b16 %v160
    %v424 = vunpack.c.h.b16 %v160
    %v425 = vunpack.c.l.b16 %v161
    %v426 = vunpack.c.h.b16 %v161
    %v427 = vunpack.c.l.b16 %v162
    %v428 = vunpack.c.h.b16 %v162
    %v429 = vunpack.c.l.b16 %v163
    %v430 = vunpack.c.h.b16 %v163
    %v431 = vunpack.c.l.b16 %v164
    %v432 = vunpack.c.h.b16 %v164
    %v433 = vunpack.c.l.b16 %v165
    %v434 = vunpack.c.h.b16 %v165
    %v435 = vunpack.c.l.b16 %v166
    %v436 = vunpack.c.h.b16 %v166
    %v437 = vunpack.c.l.b16 %v167
    %v438 = vunpack.c.h.b16 %v167
    %v439 = vunpack.c.l.b16 %v168
    %v440 = vunpack.c.h.b16 %v168
    %v441 = vunpack.c.l.b16 %v169
    %v442 = vunpack.c.h.b16 %v169
    %v443 = vunpack.c.l.b16 %v170
    %v444 = vunpack.c.h.b16 %v170
    %v445 = vunpack.c.l.b16 %v171
    %v446 = vunpack.c.h.b16 %v171
    %v447 = vunpack.c.l.b16 %v172
    %v448 = vunpack.c.h.b16 %v172
    %v449 = vunpack.c.l.b16 %v173
    %v450 = vunpack.c.h.b16 %v173
    %v451 = vunpack.c.l.b16 %v174
    %v452 = vunpack.c.h.b16 %v174
    %v453 = vunpack.c.l.b16 %v175
    %v454 = vunpack.c.h.b16 %v175
    %v455 = vunpack.c.l.b16 %v176
    %v456 = vunpack.c.h.b16 %v176
    %v457 = vunpack.c.l.b16 %v177
    %v458 = vunpack.c.h.b16 %v177
    %v459 = vunpack.c.l.b16 %v178
    %v460 = vunpack.c.h.b16 %v178
    %v461 = vunpack.c.l.b16 %v179
    %v462 = vunpack.c.h.b16 %v179
    %v463 = vunpack.c.l.b16 %v180
    %v464 = vunpack.c.h.b16 %v180
    %v465 = vunpack.c.l.b16 %v181
    %v466 = vunpack.c.h.b16 %v181
    %v467 = vunpack.c.l.b16 %v182
    %v468 = vunpack.c.h.b16 %v182
    %v469 = vunpack.c.l.b16 %v183
    %v470 = vunpack.c.h.b16 %v183
    %v471 = vunpack.c.l.b16 %v184
    %v472 = vunpack.c.h.b16 %v184
    %v473 = vunpack.c.l.b16 %v185
    %v474 = vunpack.c.h.b16 %v185
    %v475 = vunpack.c.l.b16 %v186
    %v476 = vunpack.c.h.b16 %v186
    %v477 = vunpack.c.l.b16 %v187
    %v478 = vunpack.c.h.b16 %v187
    %v479 = vunpack.c.l.b16 %v188
    %v480 = vunpack.c.h.b16 %v188
    %v481 = vunpack.c.l.b16 %v189
    %v482 = vunpack.c.h.b16 %v189
    %v483 = vunpack.c.l.b16 %v190
    %v484 = vunpack.c.h.b16 %v190
    %v485 = vunpack.c.l.b16 %v191
    %v486 = vunpack.c.h.b16 %v191
    %v487 = vunpack.c.l.b16 %v192
    %v488 = vunpack.c.h.b16 %v192
    %v489 = vunpack.c.l.b16 %v193
    %v490 = vunpack.c.h.b16 %v193
    %v491 = vunpack.c.l.b16 %v194
    %v492 = vunpack.c.h.b16 %v194
    %v493 = vunpack.c.l.b16 %v195
    %v494 = vunpack.c.h.b16 %v195
    %v495 = vunpack.c.l.b16 %v196
    %v496 = vunpack.c.h.b16 %v196
    %v497 = vpack.c.b16 %v307, %v305
    %v498 = vpack.c.b16 %v308, %v306
    %v499 = vpack.c.b16 %v311, %v309
    %v500 = vpack.c.b16 %v312, %v310
    %v501 = vpack.c.b16 %v315, %v313
    %v502 = vpack.c.b16 %v316, %v314
    %v503 = vpack.c.b16 %v319, %v317
    %v504 = vpack.c.b16 %v320, %v318
    %v505 = vpack.c.b16 %v323, %v321
    %v506 = vpack.c.b16 %v324, %v322
    %v507 = vpack.c.b16 %v327, %v325
    %v508 = vpack.c.b16 %v328, %v326
    %v509 = vpack.c.b16 %v331, %v329
    %v510 = vpack.c.b16 %v332, %v330
    %v511 = vpack.c.b16 %v335, %v333
    %v512 = vpack.c.b16 %v336, %v334
    %v513 = vpack.c.b16 %v339, %v337
    %v514 = vpack.c.b16 %v340, %v338
    %v515 = vpack.c.b16 %v343, %v341
    %v516 = vpack.c.b16 %v344, %v342
    %v517 = vpack.c.b16 %v347, %v345
    %v518 = vpack.c.b16 %v348, %v346
    %v519 = vpack.c.b16 %v351, %v349
    %v520 = vpack.c.b16 %v352, %v350
    %v521 = vpack.c.b16 %v355, %v353
    %v522 = vpack.c.b16 %v356, %v354
    %v523 = vpack.c.b16 %v359, %v357
    %v524 = vpack.c.b16 %v360, %v358
    %v525 = vpack.c.b16 %v363, %v361
    %v526 = vpack.c.b16 %v364, %v362
    %v527 = vpack.c.b16 %v367, %v365
    %v528 = vpack.c.b16 %v368, %v366
    %v529 = vpack.c.b16 %v371, %v369
    %v530 = vpack.c.b16 %v372, %v370
    %v531 = vpack.c.b16 %v375, %v373
    %v532 = vpack.c.b16 %v376, %v374
    %v533 = vpack.c.b16 %v379, %v377
    %v534 = vpack.c.b16 %v380, %v378
    %v535 = vpack.c.b16 %v383, %v381
    %v536 = vpack.c.b16 %v384, %v382
    %v537 = vpack.c.b16 %v387, %v385
    %v538 = vpack.c.b16 %v388, %v386
    %v539 = vpack.c.b16 %v391, %v389
    %v540 = vpack.c.b16 %v392, %v390
    %v541 = vpack.c.b16 %v395, %v393
    %v542 = vpack.c.b16 %v396, %v394
    %v543 = vpack.c.b16 %v399, %v397
    %v544 = vpack.c.b16 %v400, %v398
    %v545 = vpack.c.b16 %v403, %v401
    %v546 = vpack.c.b16 %v404, %v402
    %v547 = vpack.c.b16 %v407, %v405
    %v548 = vpack.c.b16 %v408, %v406
    %v549 = vpack.c.b16 %v411, %v409
    %v550 = vpack.c.b16 %v412, %v410
    %v551 = vpack.c.b16 %v415, %v413
    %v552 = vpack.c.b16 %v416, %v414
    %v553 = vpack.c.b16 %v419, %v417
    %v554 = vpack.c.b16 %v420, %v418
    %v555 = vpack.c.b16 %v423, %v421
    %v556 = vpack.c.b16 %v424, %v422
    %v557 = vpack.c.b16 %v427, %v425
    %v558 = vpack.c.b16 %v428, %v426
    %v559 = vpack.c.b16 %v431, %v429
    %v560 = vpack.c.b16 %v432, %v430
    %v561 = vpack.c.b16 %v435, %v433
    %v562 = vpack.c.b16 %v436, %v434
    %v563 = vpack.c.b16 %v439, %v437
    %v564 = vpack.c.b16 %v440, %v438
    %v565 = vpack.c.b16 %v443, %v441
    %v566 = vpack.c.b16 %v444, %v442
    %v567 = vpack.c.b16 %v447, %v445
    %v568 = vpack.c.b16 %v448, %v446
    %v569 = vpack.c.b16 %v451, %v449
    %v570 = vpack.c.b16 %v452, %v450
    %v571 = vpack.c.b16 %v455, %v453
    %v572 = vpack.c.b16 %v456, %v454
    %v573 = vpack.c.b16 %v459, %v457
    %v574 = vpack.c.b16 %v460, %v458
    %v575 = vpack.c.b16 %v463, %v461
    %v576 = vpack.c.b16 %v464, %v462
    %v577 = vpack.c.b16 %v467, %v465
    %v578 = vpack.c.b16 %v468, %v466
    %v579 = vpack.c.b16 %v471, %v469
    %v580 = vpack.c.b16 %v472, %v470
    %v581 = vpack.c.b16 %v475, %v473
    %v582 = vpack.c.b16 %v476, %v474
    %v583 = vpack.c.b16 %v479, %v477
    %v584 = vpack.c.b16 %v480, %v478
    %v585 = vpack.c.b16 %v483, %v481
    %v586 = vpack.c.b16 %v484, %v482
    %v587 = vpack.c.b16 %v487, %v485
    %v588 = vpack.c.b16 %v488, %v486
    %v589 = vpack.c.b16 %v491, %v489
    %v590 = vpack.c.b16 %v492, %v490
    %v591 = vpack.c.b16 %v495, %v493
    %v592 = vpack.c.b16 %v496, %v494
    %689 = vmatprep.subr.bf16.mxu0 %v498
    %690 = vmatpush1.bf16.msra.mxu0 %v497
    %691 = vmatprep.subr.bf16.mxu0 %v500
    %692 = vmatpush1.bf16.msra.mxu0 %v499
    %693 = vmatprep.subr.bf16.mxu0 %v502
    %694 = vmatpush1.bf16.msra.mxu0 %v501
    %695 = vmatprep.subr.bf16.mxu0 %v504
    %696 = vmatpush1.bf16.msra.mxu0 %v503
    %697 = vmatprep.subr.bf16.mxu0 %v506
    %698 = vmatpush1.bf16.msra.mxu0 %v505
    %699 = vmatprep.subr.bf16.mxu0 %v508
    %700 = vmatpush1.bf16.msra.mxu0 %v507
    %701 = vmatprep.subr.bf16.mxu0 %v510
    %702 = vmatpush1.bf16.msra.mxu0 %v509
    %703 = vmatprep.subr.bf16.mxu0 %v512
    %704 = vmatpush1.bf16.msra.mxu0 %v511
    %705 = vmatprep.subr.bf16.mxu0 %v514
    %706 = vmatpush1.bf16.msra.mxu0 %v513
    %707 = vmatprep.subr.bf16.mxu0 %v516
    %708 = vmatpush1.bf16.msra.mxu0 %v515
    %709 = vmatprep.subr.bf16.mxu0 %v518
    %710 = vmatpush1.bf16.msra.mxu0 %v517
    %711 = vmatprep.subr.bf16.mxu0 %v520
    %712 = vmatpush1.bf16.msra.mxu0 %v519
    %713 = vmatprep.subr.bf16.mxu0 %v522
    %714 = vmatpush1.bf16.msra.mxu0 %v521
    %715 = vmatprep.subr.bf16.mxu0 %v524
    %716 = vmatpush1.bf16.msra.mxu0 %v523
    %717 = vmatprep.subr.bf16.mxu0 %v526
    %718 = vmatpush1.bf16.msra.mxu0 %v525
    %719 = vmatprep.subr.bf16.mxu0 %v528
    %720 = vmatpush1.bf16.msra.mxu0 %v527
    %721 = vmatprep.mubr.bf16.mxu0 %v96
    %722 = vmatmul.mubr.bf16.gmra.mrb[0].mxu0 %v95
    %v723 = vpop.f32.mrb[0].mxu0
    %v724 = vadd.f32 %v202, %v723
    %v725 = vpop.f32.mrb[0].mxu0
    %v726 = vadd.f32 %v206, %v725
    %v727 = vpop.f32.mrb[0].mxu0
    %v728 = vadd.f32 %v202, %v727
    %v729 = vpop.f32.mrb[0].mxu0
    %v730 = vadd.f32 %v206, %v729
    %731 = vdwg.mxu0
    %732 = vmatprep.subr.bf16.mxu0 %v530
    %733 = vmatpush1.bf16.msra.mxu0 %v529
    %734 = vmatprep.subr.bf16.mxu0 %v532
    %735 = vmatpush1.bf16.msra.mxu0 %v531
    %736 = vmatprep.subr.bf16.mxu0 %v534
    %737 = vmatpush1.bf16.msra.mxu0 %v533
    %738 = vmatprep.subr.bf16.mxu0 %v536
    %739 = vmatpush1.bf16.msra.mxu0 %v535
    %740 = vmatprep.subr.bf16.mxu0 %v538
    %741 = vmatpush1.bf16.msra.mxu0 %v537
    %742 = vmatprep.subr.bf16.mxu0 %v540
    %743 = vmatpush1.bf16.msra.mxu0 %v539
    %744 = vmatprep.subr.bf16.mxu0 %v542
    %745 = vmatpush1.bf16.msra.mxu0 %v541
    %746 = vmatprep.subr.bf16.mxu0 %v544
    %747 = vmatpush1.bf16.msra.mxu0 %v543
    %748 = vmatprep.subr.bf16.mxu0 %v546
    %749 = vmatpush1.bf16.msra.mxu0 %v545
    %750 = vmatprep.subr.bf16.mxu0 %v548
    %751 = vmatpush1.bf16.msra.mxu0 %v547
    %752 = vmatprep.subr.bf16.mxu0 %v550
    %753 = vmatpush1.bf16.msra.mxu0 %v549
    %754 = vmatprep.subr.bf16.mxu0 %v552
    %755 = vmatpush1.bf16.msra.mxu0 %v551
    %756 = vmatprep.subr.bf16.mxu0 %v554
    %757 = vmatpush1.bf16.msra.mxu0 %v553
    %758 = vmatprep.subr.bf16.mxu0 %v556
    %759 = vmatpush1.bf16.msra.mxu0 %v555
    %760 = vmatprep.subr.bf16.mxu0 %v558
    %761 = vmatpush1.bf16.msra.mxu0 %v557
    %762 = vmatprep.subr.bf16.mxu0 %v560
    %763 = vmatpush1.bf16.msra.mxu0 %v559
    %764 = vmatprep.mubr.bf16.mxu0 %v98
    %765 = vmatmul.mubr.bf16.gmra.mrb[0].mxu0 %v97
    %v766 = vpop.f32.mrb[0].mxu0
    %v767 = vadd.f32 %v724, %v766
    %v768 = vpop.f32.mrb[0].mxu0
    %v769 = vadd.f32 %v726, %v768
    %v770 = vpop.f32.mrb[0].mxu0
    %v771 = vadd.f32 %v728, %v770
    %v772 = vpop.f32.mrb[0].mxu0
    %v773 = vadd.f32 %v730, %v772
    %774 = vdwg.mxu0
    %775 = vmatprep.subr.bf16.mxu0 %v562
    %776 = vmatpush1.bf16.msra.mxu0 %v561
    %777 = vmatprep.subr.bf16.mxu0 %v564
    %778 = vmatpush1.bf16.msra.mxu0 %v563
    %779 = vmatprep.subr.bf16.mxu0 %v566
    %780 = vmatpush1.bf16.msra.mxu0 %v565
    %781 = vmatprep.subr.bf16.mxu0 %v568
    %782 = vmatpush1.bf16.msra.mxu0 %v567
    %783 = vmatprep.subr.bf16.mxu0 %v570
    %784 = vmatpush1.bf16.msra.mxu0 %v569
    %785 = vmatprep.subr.bf16.mxu0 %v572
    %786 = vmatpush1.bf16.msra.mxu0 %v571
    %787 = vmatprep.subr.bf16.mxu0 %v574
    %788 = vmatpush1.bf16.msra.mxu0 %v573
    %789 = vmatprep.subr.bf16.mxu0 %v576
    %790 = vmatpush1.bf16.msra.mxu0 %v575
    %791 = vmatprep.subr.bf16.mxu0 %v578
    %792 = vmatpush1.bf16.msra.mxu0 %v577
    %793 = vmatprep.subr.bf16.mxu0 %v580
    %794 = vmatpush1.bf16.msra.mxu0 %v579
    %795 = vmatprep.subr.bf16.mxu0 %v582
    %796 = vmatpush1.bf16.msra.mxu0 %v581
    %797 = vmatprep.subr.bf16.mxu0 %v584
    %798 = vmatpush1.bf16.msra.mxu0 %v583
    %799 = vmatprep.subr.bf16.mxu0 %v586
    %800 = vmatpush1.bf16.msra.mxu0 %v585
    %801 = vmatprep.subr.bf16.mxu0 %v588
    %802 = vmatpush1.bf16.msra.mxu0 %v587
    %803 = vmatprep.subr.bf16.mxu0 %v590
    %804 = vmatpush1.bf16.msra.mxu0 %v589
    %805 = vmatprep.subr.bf16.mxu0 %v592
    %806 = vmatpush1.bf16.msra.mxu0 %v591
    %807 = vmatprep.mubr.bf16.mxu0 %v100
    %808 = vmatmul.mubr.bf16.gmra.mrb[0].mxu0 %v99
    %v809 = vpop.f32.mrb[0].mxu0
    %v810 = vadd.f32 %v767, %v809
    %v811 = vpop.f32.mrb[0].mxu0
    %v812 = vadd.f32 %v769, %v811
    %v813 = vpop.f32.mrb[0].mxu0
    %v814 = vadd.f32 %v771, %v813
    %v815 = vpop.f32.mrb[0].mxu0
    %v816 = vadd.f32 %v773, %v815
    %817 = vdwg.mxu0
    %v818 = vpack.c.bf16 %v814, %v810
    %v819 = vpack.c.bf16 %v816, %v812
    %v820 = vtanh.bf16.pop %v818
    %v821 = vtanh.bf16.pop %v819
    %v822 = vld [vmem:[#allocation7] sm:$0xff]
    %v823 = vld [vmem:[#allocation7 + $0x8] sm:$0xff]
    %v824 = vld [vmem:[#allocation7 + $0x10] sm:$0xff]
    %v825 = vld [vmem:[#allocation7 + $0x18] sm:$0xff]
    %v826 = vld [vmem:[#allocation7 + $0x20] sm:$0xff]
    %v827 = vld [vmem:[#allocation7 + $0x28] sm:$0xff]
    %v828 = vld [vmem:[#allocation7 + $0x30] sm:$0xff]
    %v829 = vld [vmem:[#allocation7 + $0x38] sm:$0xff]
    %v830 = vld [vmem:[#allocation7 + $0x40] sm:$0xff]
    %v831 = vld [vmem:[#allocation7 + $0x48] sm:$0xff]
    %v832 = vld [vmem:[#allocation7 + $0x50] sm:$0xff]
    %v833 = vld [vmem:[#allocation7 + $0x58] sm:$0xff]
    %v834 = vld [vmem:[#allocation7 + $0x60] sm:$0xff]
    %v835 = vld [vmem:[#allocation7 + $0x68] sm:$0xff]
    %v836 = vld [vmem:[#allocation7 + $0x70] sm:$0xff]
    %v837 = vld [vmem:[#allocation7 + $0x78] sm:$0xff]
    %v838 = vld [vmem:[#allocation7 + $0x80] sm:$0xff]
    %v839 = vld [vmem:[#allocation7 + $0x88] sm:$0xff]
    %v840 = vld [vmem:[#allocation7 + $0x90] sm:$0xff]
    %v841 = vld [vmem:[#allocation7 + $0x98] sm:$0xff]
    %v842 = vld [vmem:[#allocation7 + $0xa0] sm:$0xff]
    %v843 = vld [vmem:[#allocation7 + $0xa8] sm:$0xff]
    %v844 = vld [vmem:[#allocation7 + $0xb0] sm:$0xff]
    %v845 = vld [vmem:[#allocation7 + $0xb8] sm:$0xff]
    %v846 = vld [vmem:[#allocation7 + $0xc0] sm:$0xff]
    %v847 = vld [vmem:[#allocation7 + $0xc8] sm:$0xff]
    %v848 = vld [vmem:[#allocation7 + $0xd0] sm:$0xff]
    %v849 = vld [vmem:[#allocation7 + $0xd8] sm:$0xff]
    %v850 = vld [vmem:[#allocation7 + $0xe0] sm:$0xff]
    %v851 = vld [vmem:[#allocation7 + $0xe8] sm:$0xff]
    %v852 = vld [vmem:[#allocation7 + $0xf0] sm:$0xff]
    %v853 = vld [vmem:[#allocation7 + $0xf8] sm:$0xff]
    %v854 = vld [vmem:[#allocation7 + $0x100] sm:$0xff]
    %v855 = vld [vmem:[#allocation7 + $0x108] sm:$0xff]
    %v856 = vld [vmem:[#allocation7 + $0x110] sm:$0xff]
    %v857 = vld [vmem:[#allocation7 + $0x118] sm:$0xff]
    %v858 = vld [vmem:[#allocation7 + $0x120] sm:$0xff]
    %v859 = vld [vmem:[#allocation7 + $0x128] sm:$0xff]
    %v860 = vld [vmem:[#allocation7 + $0x130] sm:$0xff]
    %v861 = vld [vmem:[#allocation7 + $0x138] sm:$0xff]
    %v862 = vld [vmem:[#allocation7 + $0x140] sm:$0xff]
    %v863 = vld [vmem:[#allocation7 + $0x148] sm:$0xff]
    %v864 = vld [vmem:[#allocation7 + $0x150] sm:$0xff]
    %v865 = vld [vmem:[#allocation7 + $0x158] sm:$0xff]
    %v866 = vld [vmem:[#allocation7 + $0x160] sm:$0xff]
    %v867 = vld [vmem:[#allocation7 + $0x168] sm:$0xff]
    %v868 = vld [vmem:[#allocation7 + $0x170] sm:$0xff]
    %v869 = vld [vmem:[#allocation7 + $0x178] sm:$0xff]
    %v870 = vld [vmem:[#allocation7 + $0x180] sm:$0xff]
    %v871 = vld [vmem:[#allocation7 + $0x188] sm:$0xff]
    %v872 = vld [vmem:[#allocation7 + $0x190] sm:$0xff]
    %v873 = vld [vmem:[#allocation7 + $0x198] sm:$0xff]
    %v874 = vld [vmem:[#allocation7 + $0x1a0] sm:$0xff]
    %v875 = vld [vmem:[#allocation7 + $0x1a8] sm:$0xff]
    %v876 = vld [vmem:[#allocation7 + $0x1b0] sm:$0xff]
    %v877 = vld [vmem:[#allocation7 + $0x1b8] sm:$0xff]
    %v878 = vld [vmem:[#allocation7 + $0x1c0] sm:$0xff]
    %v879 = vld [vmem:[#allocation7 + $0x1c8] sm:$0xff]
    %v880 = vld [vmem:[#allocation7 + $0x1d0] sm:$0xff]
    %v881 = vld [vmem:[#allocation7 + $0x1d8] sm:$0xff]
    %v882 = vld [vmem:[#allocation7 + $0x1e0] sm:$0xff]
    %v883 = vld [vmem:[#allocation7 + $0x1e8] sm:$0xff]
    %v884 = vld [vmem:[#allocation7 + $0x1f0] sm:$0xff]
    %v885 = vld [vmem:[#allocation7 + $0x1f8] sm:$0xff]
    %v886 = vld [vmem:[%s4] sm:$0xf]
    %v888 = vlaneseq
    %v889 = vshrl.u32 %v888, 7
    %v890 = vsub.s32 0, %v889
    %v891 = vrot.slane %v886, %v890
    %v892 = vlaneseq
    %v893 = vshrl.u32 %v892, 7
    %v894 = vsub.s32 1, %v893
    %v895 = vrot.slane %v886, %v894
    %v896 = vlaneseq
    %v897 = vshrl.u32 %v896, 7
    %v898 = vsub.s32 2, %v897
    %v899 = vrot.slane %v886, %v898
    %v900 = vlaneseq
    %v901 = vshrl.u32 %v900, 7
    %v902 = vsub.s32 3, %v901
    %v903 = vrot.slane %v886, %v902
    %v972 = vunpack.c.l.b16 %v822
    %v973 = vunpack.c.h.b16 %v822
    %v974 = vunpack.c.l.b16 %v823
    %v975 = vunpack.c.h.b16 %v823
    %v976 = vunpack.c.l.b16 %v824
    %v977 = vunpack.c.h.b16 %v824
    %v978 = vunpack.c.l.b16 %v825
    %v979 = vunpack.c.h.b16 %v825
    %v980 = vunpack.c.l.b16 %v826
    %v981 = vunpack.c.h.b16 %v826
    %v982 = vunpack.c.l.b16 %v827
    %v983 = vunpack.c.h.b16 %v827
    %v984 = vunpack.c.l.b16 %v828
    %v985 = vunpack.c.h.b16 %v828
    %v986 = vunpack.c.l.b16 %v829
    %v987 = vunpack.c.h.b16 %v829
    %v988 = vunpack.c.l.b16 %v830
    %v989 = vunpack.c.h.b16 %v830
    %v990 = vunpack.c.l.b16 %v831
    %v991 = vunpack.c.h.b16 %v831
    %v992 = vunpack.c.l.b16 %v832
    %v993 = vunpack.c.h.b16 %v832
    %v994 = vunpack.c.l.b16 %v833
    %v995 = vunpack.c.h.b16 %v833
    %v996 = vunpack.c.l.b16 %v834
    %v997 = vunpack.c.h.b16 %v834
    %v998 = vunpack.c.l.b16 %v835
    %v999 = vunpack.c.h.b16 %v835
    %v1000 = vunpack.c.l.b16 %v836
    %v1001 = vunpack.c.h.b16 %v836
    %v1002 = vunpack.c.l.b16 %v837
    %v1003 = vunpack.c.h.b16 %v837
    %v1004 = vunpack.c.l.b16 %v838
    %v1005 = vunpack.c.h.b16 %v838
    %v1006 = vunpack.c.l.b16 %v839
    %v1007 = vunpack.c.h.b16 %v839
    %v1008 = vunpack.c.l.b16 %v840
    %v1009 = vunpack.c.h.b16 %v840
    %v1010 = vunpack.c.l.b16 %v841
    %v1011 = vunpack.c.h.b16 %v841
    %v1012 = vunpack.c.l.b16 %v842
    %v1013 = vunpack.c.h.b16 %v842
    %v1014 = vunpack.c.l.b16 %v843
    %v1015 = vunpack.c.h.b16 %v843
    %v1016 = vunpack.c.l.b16 %v844
    %v1017 = vunpack.c.h.b16 %v844
    %v1018 = vunpack.c.l.b16 %v845
    %v1019 = vunpack.c.h.b16 %v845
    %v1020 = vunpack.c.l.b16 %v846
    %v1021 = vunpack.c.h.b16 %v846
    %v1022 = vunpack.c.l.b16 %v847
    %v1023 = vunpack.c.h.b16 %v847
    %v1024 = vunpack.c.l.b16 %v848
    %v1025 = vunpack.c.h.b16 %v848
    %v1026 = vunpack.c.l.b16 %v849
    %v1027 = vunpack.c.h.b16 %v849
    %v1028 = vunpack.c.l.b16 %v850
    %v1029 = vunpack.c.h.b16 %v850
    %v1030 = vunpack.c.l.b16 %v851
    %v1031 = vunpack.c.h.b16 %v851
    %v1032 = vunpack.c.l.b16 %v852
    %v1033 = vunpack.c.h.b16 %v852
    %v1034 = vunpack.c.l.b16 %v853
    %v1035 = vunpack.c.h.b16 %v853
    %v1036 = vunpack.c.l.b16 %v854
    %v1037 = vunpack.c.h.b16 %v854
    %v1038 = vunpack.c.l.b16 %v855
    %v1039 = vunpack.c.h.b16 %v855
    %v1040 = vunpack.c.l.b16 %v856
    %v1041 = vunpack.c.h.b16 %v856
    %v1042 = vunpack.c.l.b16 %v857
    %v1043 = vunpack.c.h.b16 %v857
    %v1044 = vunpack.c.l.b16 %v858
    %v1045 = vunpack.c.h.b16 %v858
    %v1046 = vunpack.c.l.b16 %v859
    %v1047 = vunpack.c.h.b16 %v859
    %v1048 = vunpack.c.l.b16 %v860
    %v1049 = vunpack.c.h.b16 %v860
    %v1050 = vunpack.c.l.b16 %v861
    %v1051 = vunpack.c.h.b16 %v861
    %v1052 = vunpack.c.l.b16 %v862
    %v1053 = vunpack.c.h.b16 %v862
    %v1054 = vunpack.c.l.b16 %v863
    %v1055 = vunpack.c.h.b16 %v863
    %v1056 = vunpack.c.l.b16 %v864
    %v1057 = vunpack.c.h.b16 %v864
    %v1058 = vunpack.c.l.b16 %v865
    %v1059 = vunpack.c.h.b16 %v865
    %v1060 = vunpack.c.l.b16 %v866
    %v1061 = vunpack.c.h.b16 %v866
    %v1062 = vunpack.c.l.b16 %v867
    %v1063 = vunpack.c.h.b16 %v867
    %v1064 = vunpack.c.l.b16 %v868
    %v1065 = vunpack.c.h.b16 %v868
    %v1066 = vunpack.c.l.b16 %v869
    %v1067 = vunpack.c.h.b16 %v869
    %v1068 = vunpack.c.l.b16 %v870
    %v1069 = vunpack.c.h.b16 %v870
    %v1070 = vunpack.c.l.b16 %v871
    %v1071 = vunpack.c.h.b16 %v871
    %v1072 = vunpack.c.l.b16 %v872
    %v1073 = vunpack.c.h.b16 %v872
    %v1074 = vunpack.c.l.b16 %v873
    %v1075 = vunpack.c.h.b16 %v873
    %v1076 = vunpack.c.l.b16 %v874
    %v1077 = vunpack.c.h.b16 %v874
    %v1078 = vunpack.c.l.b16 %v875
    %v1079 = vunpack.c.h.b16 %v875
    %v1080 = vunpack.c.l.b16 %v876
    %v1081 = vunpack.c.h.b16 %v876
    %v1082 = vunpack.c.l.b16 %v877
    %v1083 = vunpack.c.h.b16 %v877
    %v1084 = vunpack.c.l.b16 %v878
    %v1085 = vunpack.c.h.b16 %v878
    %v1086 = vunpack.c.l.b16 %v879
    %v1087 = vunpack.c.h.b16 %v879
    %v1088 = vunpack.c.l.b16 %v880
    %v1089 = vunpack.c.h.b16 %v880
    %v1090 = vunpack.c.l.b16 %v881
    %v1091 = vunpack.c.h.b16 %v881
    %v1092 = vunpack.c.l.b16 %v882
    %v1093 = vunpack.c.h.b16 %v882
    %v1094 = vunpack.c.l.b16 %v883
    %v1095 = vunpack.c.h.b16 %v883
    %v1096 = vunpack.c.l.b16 %v884
    %v1097 = vunpack.c.h.b16 %v884
    %v1098 = vunpack.c.l.b16 %v885
    %v1099 = vunpack.c.h.b16 %v885
    %v1100 = vpack.c.b16 %v976, %v972
    %v1101 = vpack.c.b16 %v977, %v973
    %v1102 = vpack.c.b16 %v978, %v974
    %v1103 = vpack.c.b16 %v979, %v975
    %v1104 = vpack.c.b16 %v984, %v980
    %v1105 = vpack.c.b16 %v985, %v981
    %v1106 = vpack.c.b16 %v986, %v982
    %v1107 = vpack.c.b16 %v987, %v983
    %v1108 = vpack.c.b16 %v992, %v988
    %v1109 = vpack.c.b16 %v993, %v989
    %v1110 = vpack.c.b16 %v994, %v990
    %v1111 = vpack.c.b16 %v995, %v991
    %v1112 = vpack.c.b16 %v1000, %v996
    %v1113 = vpack.c.b16 %v1001, %v997
    %v1114 = vpack.c.b16 %v1002, %v998
    %v1115 = vpack.c.b16 %v1003, %v999
    %v1116 = vpack.c.b16 %v1008, %v1004
    %v1117 = vpack.c.b16 %v1009, %v1005
    %v1118 = vpack.c.b16 %v1010, %v1006
    %v1119 = vpack.c.b16 %v1011, %v1007
    %v1120 = vpack.c.b16 %v1016, %v1012
    %v1121 = vpack.c.b16 %v1017, %v1013
    %v1122 = vpack.c.b16 %v1018, %v1014
    %v1123 = vpack.c.b16 %v1019, %v1015
    %v1124 = vpack.c.b16 %v1024, %v1020
    %v1125 = vpack.c.b16 %v1025, %v1021
    %v1126 = vpack.c.b16 %v1026, %v1022
    %v1127 = vpack.c.b16 %v1027, %v1023
    %v1128 = vpack.c.b16 %v1032, %v1028
    %v1129 = vpack.c.b16 %v1033, %v1029
    %v1130 = vpack.c.b16 %v1034, %v1030
    %v1131 = vpack.c.b16 %v1035, %v1031
    %v1132 = vpack.c.b16 %v1040, %v1036
    %v1133 = vpack.c.b16 %v1041, %v1037
    %v1134 = vpack.c.b16 %v1042, %v1038
    %v1135 = vpack.c.b16 %v1043, %v1039
    %v1136 = vpack.c.b16 %v1048, %v1044
    %v1137 = vpack.c.b16 %v1049, %v1045
    %v1138 = vpack.c.b16 %v1050, %v1046
    %v1139 = vpack.c.b16 %v1051, %v1047
    %v1140 = vpack.c.b16 %v1056, %v1052
    %v1141 = vpack.c.b16 %v1057, %v1053
    %v1142 = vpack.c.b16 %v1058, %v1054
    %v1143 = vpack.c.b16 %v1059, %v1055
    %v1144 = vpack.c.b16 %v1064, %v1060
    %v1145 = vpack.c.b16 %v1065, %v1061
    %v1146 = vpack.c.b16 %v1066, %v1062
    %v1147 = vpack.c.b16 %v1067, %v1063
    %v1148 = vpack.c.b16 %v1072, %v1068
    %v1149 = vpack.c.b16 %v1073, %v1069
    %v1150 = vpack.c.b16 %v1074, %v1070
    %v1151 = vpack.c.b16 %v1075, %v1071
    %v1152 = vpack.c.b16 %v1080, %v1076
    %v1153 = vpack.c.b16 %v1081, %v1077
    %v1154 = vpack.c.b16 %v1082, %v1078
    %v1155 = vpack.c.b16 %v1083, %v1079
    %v1156 = vpack.c.b16 %v1088, %v1084
    %v1157 = vpack.c.b16 %v1089, %v1085
    %v1158 = vpack.c.b16 %v1090, %v1086
    %v1159 = vpack.c.b16 %v1091, %v1087
    %v1160 = vpack.c.b16 %v1096, %v1092
    %v1161 = vpack.c.b16 %v1097, %v1093
    %v1162 = vpack.c.b16 %v1098, %v1094
    %v1163 = vpack.c.b16 %v1099, %v1095
    %1228 = vmatprep.subr.bf16.mxu0 %v1101
    %1229 = vmatpush1.bf16.msra.mxu0 %v1100
    %1230 = vmatprep.subr.bf16.mxu0 %v1105
    %1231 = vmatpush1.bf16.msra.mxu0 %v1104
    %1232 = vmatprep.subr.bf16.mxu0 %v1109
    %1233 = vmatpush1.bf16.msra.mxu0 %v1108
    %1234 = vmatprep.subr.bf16.mxu0 %v1113
    %1235 = vmatpush1.bf16.msra.mxu0 %v1112
    %1236 = vmatprep.subr.bf16.mxu0 %v1117
    %1237 = vmatpush1.bf16.msra.mxu0 %v1116
    %1238 = vmatprep.subr.bf16.mxu0 %v1121
    %1239 = vmatpush1.bf16.msra.mxu0 %v1120
    %1240 = vmatprep.subr.bf16.mxu0 %v1125
    %1241 = vmatpush1.bf16.msra.mxu0 %v1124
    %1242 = vmatprep.subr.bf16.mxu0 %v1129
    %1243 = vmatpush1.bf16.msra.mxu0 %v1128
    %1244 = vmatprep.subr.bf16.mxu0 %v1133
    %1245 = vmatpush1.bf16.msra.mxu0 %v1132
    %1246 = vmatprep.subr.bf16.mxu0 %v1137
    %1247 = vmatpush1.bf16.msra.mxu0 %v1136
    %1248 = vmatprep.subr.bf16.mxu0 %v1141
    %1249 = vmatpush1.bf16.msra.mxu0 %v1140
    %1250 = vmatprep.subr.bf16.mxu0 %v1145
    %1251 = vmatpush1.bf16.msra.mxu0 %v1144
    %1252 = vmatprep.subr.bf16.mxu0 %v1149
    %1253 = vmatpush1.bf16.msra.mxu0 %v1148
    %1254 = vmatprep.subr.bf16.mxu0 %v1153
    %1255 = vmatpush1.bf16.msra.mxu0 %v1152
    %1256 = vmatprep.subr.bf16.mxu0 %v1157
    %1257 = vmatpush1.bf16.msra.mxu0 %v1156
    %1258 = vmatprep.subr.bf16.mxu0 %v1161
    %1259 = vmatpush1.bf16.msra.mxu0 %v1160
    %1260 = vmatprep.mubr.bf16.mxu0 %v821
    %1261 = vmatmul.mubr.bf16.gmra.mrb[0].mxu0 %v820
    %v1262 = vpop.f32.mrb[0].mxu0
    %v1263 = vadd.f32 %v891, %v1262
    %v1264 = vpop.f32.mrb[0].mxu0
    %v1265 = vadd.f32 %v895, %v1264
    %v1266 = vpop.f32.mrb[0].mxu0
    %v1267 = vadd.f32 %v891, %v1266
    %v1268 = vpop.f32.mrb[0].mxu0
    %v1269 = vadd.f32 %v895, %v1268
    %1270 = vdwg.mxu0
    %1271 = vmatprep.subr.bf16.mxu0 %v1103
    %1272 = vmatpush1.bf16.msra.mxu0 %v1102
    %1273 = vmatprep.subr.bf16.mxu0 %v1107
    %1274 = vmatpush1.bf16.msra.mxu0 %v1106
    %1275 = vmatprep.subr.bf16.mxu0 %v1111
    %1276 = vmatpush1.bf16.msra.mxu0 %v1110
    %1277 = vmatprep.subr.bf16.mxu0 %v1115
    %1278 = vmatpush1.bf16.msra.mxu0 %v1114
    %1279 = vmatprep.subr.bf16.mxu0 %v1119
    %1280 = vmatpush1.bf16.msra.mxu0 %v1118
    %1281 = vmatprep.subr.bf16.mxu0 %v1123
    %1282 = vmatpush1.bf16.msra.mxu0 %v1122
    %1283 = vmatprep.subr.bf16.mxu0 %v1127
    %1284 = vmatpush1.bf16.msra.mxu0 %v1126
    %1285 = vmatprep.subr.bf16.mxu0 %v1131
    %1286 = vmatpush1.bf16.msra.mxu0 %v1130
    %1287 = vmatprep.subr.bf16.mxu0 %v1135
    %1288 = vmatpush1.bf16.msra.mxu0 %v1134
    %1289 = vmatprep.subr.bf16.mxu0 %v1139
    %1290 = vmatpush1.bf16.msra.mxu0 %v1138
    %1291 = vmatprep.subr.bf16.mxu0 %v1143
    %1292 = vmatpush1.bf16.msra.mxu0 %v1142
    %1293 = vmatprep.subr.bf16.mxu0 %v1147
    %1294 = vmatpush1.bf16.msra.mxu0 %v1146
    %1295 = vmatprep.subr.bf16.mxu0 %v1151
    %1296 = vmatpush1.bf16.msra.mxu0 %v1150
    %1297 = vmatprep.subr.bf16.mxu0 %v1155
    %1298 = vmatpush1.bf16.msra.mxu0 %v1154
    %1299 = vmatprep.subr.bf16.mxu0 %v1159
    %1300 = vmatpush1.bf16.msra.mxu0 %v1158
    %1301 = vmatprep.subr.bf16.mxu0 %v1163
    %1302 = vmatpush1.bf16.msra.mxu0 %v1162
    %1303 = vmatprep.mubr.bf16.mxu0 %v821
    %1304 = vmatmul.mubr.bf16.gmra.mrb[0].mxu0 %v820
    %v1305 = vpop.f32.mrb[0].mxu0
    %v1306 = vadd.f32 %v899, %v1305
    %v1307 = vpop.f32.mrb[0].mxu0
    %v1308 = vadd.f32 %v903, %v1307
    %v1309 = vpop.f32.mrb[0].mxu0
    %v1310 = vadd.f32 %v899, %v1309
    %v1311 = vpop.f32.mrb[0].mxu0
    %v1312 = vadd.f32 %v903, %v1311
    %1313 = vdwg.mxu0
    %v1314 = vpack.c.bf16 %v1267, %v1263
    %v1315 = vpack.c.bf16 %v1269, %v1265
    %v1316 = vpack.c.bf16 %v1310, %v1306
    %v1317 = vpack.c.bf16 %v1312, %v1308
    %v1318 = vtanh.bf16.pop %v1314
    %v1319 = vtanh.bf16.pop %v1315
    %v1320 = vtanh.bf16.pop %v1316
    %v1321 = vtanh.bf16.pop %v1317
    %v1322 = vld [vmem:[#allocation8] sm:$0xf]
    %v1323 = vld [vmem:[#allocation8 + $0x4] sm:$0xf]
    %v1324 = vld [vmem:[#allocation8 + $0x8] sm:$0xf]
    %v1325 = vld [vmem:[#allocation8 + $0xc] sm:$0xf]
    %v1326 = vld [vmem:[#allocation8 + $0x10] sm:$0xf]
    %v1327 = vld [vmem:[#allocation8 + $0x14] sm:$0xf]
    %v1328 = vld [vmem:[#allocation8 + $0x18] sm:$0xf]
    %v1329 = vld [vmem:[#allocation8 + $0x1c] sm:$0xf]
    %v1330 = vld [vmem:[#allocation8 + $0x20] sm:$0xf]
    %v1331 = vld [vmem:[#allocation8 + $0x24] sm:$0xf]
    %v1332 = vld [vmem:[#allocation8 + $0x28] sm:$0xf]
    %v1333 = vld [vmem:[#allocation8 + $0x2c] sm:$0xf]
    %v1334 = vld [vmem:[#allocation8 + $0x30] sm:$0xf]
    %v1335 = vld [vmem:[#allocation8 + $0x34] sm:$0xf]
    %v1336 = vld [vmem:[#allocation8 + $0x38] sm:$0xf]
    %v1337 = vld [vmem:[#allocation8 + $0x3c] sm:$0xf]
    %v1338 = vld [vmem:[#allocation8 + $0x40] sm:$0xf]
    %v1339 = vld [vmem:[#allocation8 + $0x44] sm:$0xf]
    %v1340 = vld [vmem:[#allocation8 + $0x48] sm:$0xf]
    %v1341 = vld [vmem:[#allocation8 + $0x4c] sm:$0xf]
    %v1342 = vld [vmem:[#allocation8 + $0x50] sm:$0xf]
    %v1343 = vld [vmem:[#allocation8 + $0x54] sm:$0xf]
    %v1344 = vld [vmem:[#allocation8 + $0x58] sm:$0xf]
    %v1345 = vld [vmem:[#allocation8 + $0x5c] sm:$0xf]
    %v1346 = vld [vmem:[#allocation8 + $0x60] sm:$0xf]
    %v1347 = vld [vmem:[#allocation8 + $0x64] sm:$0xf]
    %v1348 = vld [vmem:[#allocation8 + $0x68] sm:$0xf]
    %v1349 = vld [vmem:[#allocation8 + $0x6c] sm:$0xf]
    %v1350 = vld [vmem:[#allocation8 + $0x70] sm:$0xf]
    %v1351 = vld [vmem:[#allocation8 + $0x74] sm:$0xf]
    %v1352 = vld [vmem:[#allocation8 + $0x78] sm:$0xf]
    %v1353 = vld [vmem:[#allocation8 + $0x7c] sm:$0xf]
    %v1354 = vld [vmem:[#allocation8 + $0x80] sm:$0xf]
    %v1355 = vld [vmem:[#allocation8 + $0x84] sm:$0xf]
    %v1356 = vld [vmem:[#allocation8 + $0x88] sm:$0xf]
    %v1357 = vld [vmem:[#allocation8 + $0x8c] sm:$0xf]
    %v1358 = vld [vmem:[#allocation8 + $0x90] sm:$0xf]
    %v1359 = vld [vmem:[#allocation8 + $0x94] sm:$0xf]
    %v1360 = vld [vmem:[#allocation8 + $0x98] sm:$0xf]
    %v1361 = vld [vmem:[#allocation8 + $0x9c] sm:$0xf]
    %v1362 = vld [vmem:[#allocation8 + $0xa0] sm:$0xf]
    %v1363 = vld [vmem:[#allocation8 + $0xa4] sm:$0xf]
    %v1364 = vld [vmem:[#allocation8 + $0xa8] sm:$0xf]
    %v1365 = vld [vmem:[#allocation8 + $0xac] sm:$0xf]
    %v1366 = vld [vmem:[#allocation8 + $0xb0] sm:$0xf]
    %v1367 = vld [vmem:[#allocation8 + $0xb4] sm:$0xf]
    %v1368 = vld [vmem:[#allocation8 + $0xb8] sm:$0xf]
    %v1369 = vld [vmem:[#allocation8 + $0xbc] sm:$0xf]
    %v1370 = vld [vmem:[#allocation8 + $0xc0] sm:$0xf]
    %v1371 = vld [vmem:[#allocation8 + $0xc4] sm:$0xf]
    %v1372 = vld [vmem:[#allocation8 + $0xc8] sm:$0xf]
    %v1373 = vld [vmem:[#allocation8 + $0xcc] sm:$0xf]
    %v1374 = vld [vmem:[#allocation8 + $0xd0] sm:$0xf]
    %v1375 = vld [vmem:[#allocation8 + $0xd4] sm:$0xf]
    %v1376 = vld [vmem:[#allocation8 + $0xd8] sm:$0xf]
    %v1377 = vld [vmem:[#allocation8 + $0xdc] sm:$0xf]
    %v1378 = vld [vmem:[#allocation8 + $0xe0] sm:$0xf]
    %v1379 = vld [vmem:[#allocation8 + $0xe4] sm:$0xf]
    %v1380 = vld [vmem:[#allocation8 + $0xe8] sm:$0xf]
    %v1381 = vld [vmem:[#allocation8 + $0xec] sm:$0xf]
    %v1382 = vld [vmem:[#allocation8 + $0xf0] sm:$0xf]
    %v1383 = vld [vmem:[#allocation8 + $0xf4] sm:$0xf]
    %v1384 = vld [vmem:[#allocation8 + $0xf8] sm:$0xf]
    %v1385 = vld [vmem:[#allocation8 + $0xfc] sm:$0xf]
    %v1386 = vld [vmem:[%s6] sm:$0x1]
    %v1388 = vlaneseq
    %v1389 = vshrl.u32 %v1388, 7
    %v1390 = vsub.s32 0, %v1389
    %v1391 = vrot.slane %v1386, %v1390
    %v1457 = vunpack.c.l.b16 %v1322
    %v1458 = vunpack.c.l.b16 %v1323
    %v1459 = vunpack.c.l.b16 %v1324
    %v1460 = vunpack.c.l.b16 %v1325
    %v1461 = vunpack.c.l.b16 %v1326
    %v1462 = vunpack.c.l.b16 %v1327
    %v1463 = vunpack.c.l.b16 %v1328
    %v1464 = vunpack.c.l.b16 %v1329
    %v1465 = vunpack.c.l.b16 %v1330
    %v1466 = vunpack.c.l.b16 %v1331
    %v1467 = vunpack.c.l.b16 %v1332
    %v1468 = vunpack.c.l.b16 %v1333
    %v1469 = vunpack.c.l.b16 %v1334
    %v1470 = vunpack.c.l.b16 %v1335
    %v1471 = vunpack.c.l.b16 %v1336
    %v1472 = vunpack.c.l.b16 %v1337
    %v1473 = vunpack.c.l.b16 %v1338
    %v1474 = vunpack.c.l.b16 %v1339
    %v1475 = vunpack.c.l.b16 %v1340
    %v1476 = vunpack.c.l.b16 %v1341
    %v1477 = vunpack.c.l.b16 %v1342
    %v1478 = vunpack.c.l.b16 %v1343
    %v1479 = vunpack.c.l.b16 %v1344
    %v1480 = vunpack.c.l.b16 %v1345
    %v1481 = vunpack.c.l.b16 %v1346
    %v1482 = vunpack.c.l.b16 %v1347
    %v1483 = vunpack.c.l.b16 %v1348
    %v1484 = vunpack.c.l.b16 %v1349
    %v1485 = vunpack.c.l.b16 %v1350
    %v1486 = vunpack.c.l.b16 %v1351
    %v1487 = vunpack.c.l.b16 %v1352
    %v1488 = vunpack.c.l.b16 %v1353
    %v1489 = vunpack.c.l.b16 %v1354
    %v1490 = vunpack.c.l.b16 %v1355
    %v1491 = vunpack.c.l.b16 %v1356
    %v1492 = vunpack.c.l.b16 %v1357
    %v1493 = vunpack.c.l.b16 %v1358
    %v1494 = vunpack.c.l.b16 %v1359
    %v1495 = vunpack.c.l.b16 %v1360
    %v1496 = vunpack.c.l.b16 %v1361
    %v1497 = vunpack.c.l.b16 %v1362
    %v1498 = vunpack.c.l.b16 %v1363
    %v1499 = vunpack.c.l.b16 %v1364
    %v1500 = vunpack.c.l.b16 %v1365
    %v1501 = vunpack.c.l.b16 %v1366
    %v1502 = vunpack.c.l.b16 %v1367
    %v1503 = vunpack.c.l.b16 %v1368
    %v1504 = vunpack.c.l.b16 %v1369
    %v1505 = vunpack.c.l.b16 %v1370
    %v1506 = vunpack.c.l.b16 %v1371
    %v1507 = vunpack.c.l.b16 %v1372
    %v1508 = vunpack.c.l.b16 %v1373
    %v1509 = vunpack.c.l.b16 %v1374
    %v1510 = vunpack.c.l.b16 %v1375
    %v1511 = vunpack.c.l.b16 %v1376
    %v1512 = vunpack.c.l.b16 %v1377
    %v1513 = vunpack.c.l.b16 %v1378
    %v1514 = vunpack.c.l.b16 %v1379
    %v1515 = vunpack.c.l.b16 %v1380
    %v1516 = vunpack.c.l.b16 %v1381
    %v1517 = vunpack.c.l.b16 %v1382
    %v1518 = vunpack.c.l.b16 %v1383
    %v1519 = vunpack.c.l.b16 %v1384
    %v1520 = vunpack.c.l.b16 %v1385
    %v1521 = vpack.c.b16 %v1458, %v1457
    %v1522 = vpack.c.b16 %v1460, %v1459
    %v1523 = vpack.c.b16 %v1462, %v1461
    %v1524 = vpack.c.b16 %v1464, %v1463
    %v1525 = vpack.c.b16 %v1466, %v1465
    %v1526 = vpack.c.b16 %v1468, %v1467
    %v1527 = vpack.c.b16 %v1470, %v1469
    %v1528 = vpack.c.b16 %v1472, %v1471
    %v1529 = vpack.c.b16 %v1474, %v1473
    %v1530 = vpack.c.b16 %v1476, %v1475
    %v1531 = vpack.c.b16 %v1478, %v1477
    %v1532 = vpack.c.b16 %v1480, %v1479
    %v1533 = vpack.c.b16 %v1482, %v1481
    %v1534 = vpack.c.b16 %v1484, %v1483
    %v1535 = vpack.c.b16 %v1486, %v1485
    %v1536 = vpack.c.b16 %v1488, %v1487
    %v1537 = vpack.c.b16 %v1490, %v1489
    %v1538 = vpack.c.b16 %v1492, %v1491
    %v1539 = vpack.c.b16 %v1494, %v1493
    %v1540 = vpack.c.b16 %v1496, %v1495
    %v1541 = vpack.c.b16 %v1498, %v1497
    %v1542 = vpack.c.b16 %v1500, %v1499
    %v1543 = vpack.c.b16 %v1502, %v1501
    %v1544 = vpack.c.b16 %v1504, %v1503
    %v1545 = vpack.c.b16 %v1506, %v1505
    %v1546 = vpack.c.b16 %v1508, %v1507
    %v1547 = vpack.c.b16 %v1510, %v1509
    %v1548 = vpack.c.b16 %v1512, %v1511
    %v1549 = vpack.c.b16 %v1514, %v1513
    %v1550 = vpack.c.b16 %v1516, %v1515
    %v1551 = vpack.c.b16 %v1518, %v1517
    %v1552 = vpack.c.b16 %v1520, %v1519
    %1585 = vmatprep.subr.bf16.mxu0 0
    %1586 = vmatpush1.bf16.msra.mxu0 %v1521
    %1587 = vmatprep.subr.bf16.mxu0 0
    %1588 = vmatpush1.bf16.msra.mxu0 %v1522
    %1589 = vmatprep.subr.bf16.mxu0 0
    %1590 = vmatpush1.bf16.msra.mxu0 %v1523
    %1591 = vmatprep.subr.bf16.mxu0 0
    %1592 = vmatpush1.bf16.msra.mxu0 %v1524
    %1593 = vmatprep.subr.bf16.mxu0 0
    %1594 = vmatpush1.bf16.msra.mxu0 %v1525
    %1595 = vmatprep.subr.bf16.mxu0 0
    %1596 = vmatpush1.bf16.msra.mxu0 %v1526
    %1597 = vmatprep.subr.bf16.mxu0 0
    %1598 = vmatpush1.bf16.msra.mxu0 %v1527
    %1599 = vmatprep.subr.bf16.mxu0 0
    %1600 = vmatpush1.bf16.msra.mxu0 %v1528
    %1601 = vmatprep.subr.bf16.mxu0 0
    %1602 = vmatpush1.bf16.msra.mxu0 %v1529
    %1603 = vmatprep.subr.bf16.mxu0 0
    %1604 = vmatpush1.bf16.msra.mxu0 %v1530
    %1605 = vmatprep.subr.bf16.mxu0 0
    %1606 = vmatpush1.bf16.msra.mxu0 %v1531
    %1607 = vmatprep.subr.bf16.mxu0 0
    %1608 = vmatpush1.bf16.msra.mxu0 %v1532
    %1609 = vmatprep.subr.bf16.mxu0 0
    %1610 = vmatpush1.bf16.msra.mxu0 %v1533
    %1611 = vmatprep.subr.bf16.mxu0 0
    %1612 = vmatpush1.bf16.msra.mxu0 %v1534
    %1613 = vmatprep.subr.bf16.mxu0 0
    %1614 = vmatpush1.bf16.msra.mxu0 %v1535
    %1615 = vmatprep.subr.bf16.mxu0 0
    %1616 = vmatpush1.bf16.msra.mxu0 %v1536
    %1617 = vmatprep.mubr.bf16.mxu0 %v1319
    %1618 = vmatmul.mubr.bf16.gmra.mrb[0].mxu0 %v1318
    %v1619 = vpop.f32.mrb[0].mxu0
    %v1620 = vadd.f32 %v1391, %v1619
    %v1621 = vpop.f32.mrb[0].mxu0
    %v1622 = vpop.f32.mrb[0].mxu0
    %v1623 = vadd.f32 %v1391, %v1622
    %v1624 = vpop.f32.mrb[0].mxu0
    %1625 = vdwg.mxu0
    %1626 = vmatprep.subr.bf16.mxu0 0
    %1627 = vmatpush1.bf16.msra.mxu0 %v1537
    %1628 = vmatprep.subr.bf16.mxu0 0
    %1629 = vmatpush1.bf16.msra.mxu0 %v1538
    %1630 = vmatprep.subr.bf16.mxu0 0
    %1631 = vmatpush1.bf16.msra.mxu0 %v1539
    %1632 = vmatprep.subr.bf16.mxu0 0
    %1633 = vmatpush1.bf16.msra.mxu0 %v1540
    %1634 = vmatprep.subr.bf16.mxu0 0
    %1635 = vmatpush1.bf16.msra.mxu0 %v1541
    %1636 = vmatprep.subr.bf16.mxu0 0
    %1637 = vmatpush1.bf16.msra.mxu0 %v1542
    %1638 = vmatprep.subr.bf16.mxu0 0
    %1639 = vmatpush1.bf16.msra.mxu0 %v1543
    %1640 = vmatprep.subr.bf16.mxu0 0
    %1641 = vmatpush1.bf16.msra.mxu0 %v1544
    %1642 = vmatprep.subr.bf16.mxu0 0
    %1643 = vmatpush1.bf16.msra.mxu0 %v1545
    %1644 = vmatprep.subr.bf16.mxu0 0
    %1645 = vmatpush1.bf16.msra.mxu0 %v1546
    %1646 = vmatprep.subr.bf16.mxu0 0
    %1647 = vmatpush1.bf16.msra.mxu0 %v1547
    %1648 = vmatprep.subr.bf16.mxu0 0
    %1649 = vmatpush1.bf16.msra.mxu0 %v1548
    %1650 = vmatprep.subr.bf16.mxu0 0
    %1651 = vmatpush1.bf16.msra.mxu0 %v1549
    %1652 = vmatprep.subr.bf16.mxu0 0
    %1653 = vmatpush1.bf16.msra.mxu0 %v1550
    %1654 = vmatprep.subr.bf16.mxu0 0
    %1655 = vmatpush1.bf16.msra.mxu0 %v1551
    %1656 = vmatprep.subr.bf16.mxu0 0
    %1657 = vmatpush1.bf16.msra.mxu0 %v1552
    %1658 = vmatprep.mubr.bf16.mxu0 %v1321
    %1659 = vmatmul.mubr.bf16.gmra.mrb[0].mxu0 %v1320
    %v1660 = vpop.f32.mrb[0].mxu0
    %v1661 = vadd.f32 %v1620, %v1660
    %v1662 = vpop.f32.mrb[0].mxu0
    %v1663 = vpop.f32.mrb[0].mxu0
    %v1664 = vadd.f32 %v1623, %v1663
    %v1665 = vpop.f32.mrb[0].mxu0
    %1666 = vdwg.mxu0
    %v1667 = vtanh.pop %v1661
    %v1668 = vtanh.pop %v1664
    %1669 = vst [vmem:[#allocation10] sm:$0xff] %v1667
    %1670 = vst [vmem:[#allocation10 + $0x8] sm:$0xff] %v1668
    // Predicated region
    $region46: #{tpu_custom_call.1} parent=1 // pred_check
      _
    $region47: #{tpu_custom_call.1} parent=1 // pred_check_branch
      %1672 = sbr.rel (0) target = $region49
    $region48: #{tpu_custom_call.1} parent=1 // pred_region
      %s1674 = ssub.s32 256, 256
      %1675 = vsyncadd [#allocation4], %s1674
      %s1676 = sshll.u32 [#allocation10], 4
      %s1677 = int_to_ptr.vmem [resolvable:$true] %s1676
      %1682 = dma.vmem_to_hbm [thread:$0]  %s1677, 256, %s7, [#allocation4], 128, 128, 8
    $region49: #{tpu_custom_call.1} parent=1 // pred_fallthru
      _
    // Predicated region
    $region50: #{tpu_custom_call.1} parent=1 // pred_check
      _
    $region51: #{tpu_custom_call.1} parent=1 // pred_check_branch
      %1684 = sbr.rel (0) target = $region53
    $region52: #{tpu_custom_call.1} parent=1 // pred_region
      %1685 = dma.done [#allocation4], 256
    $region53: #{tpu_custom_call.1} parent=1 // pred_fallthru
      _
    %1686 = vsyncpa [#allocation3], 1
    %1687 = vsyncpa [#allocation6], 1
    %1688 = vsyncpa [#allocation9], 1
    %1689 = vsyncpa [#allocation4], 1

</llo_original>
